<compile_context>
chip_gen: v5e
topology: v5e:2x2
jax: 0.10.0
libtpu: 0.0.40
codegen_flags: <defaults>
</compile_context>

<pallas_src>
import math

import jax
import jax.numpy as jnp
from jax.experimental import pallas as pl
from jax.experimental.pallas import tpu as pltpu


_TILE_BYTES = 8 << 20          # per-output-tile budget (double-buffered by Pallas)
_VMEM_LIMIT_BYTES = 48 << 20   # 2 x 8 MiB output buffers + resident input + slack
_MIN_PALLAS_BYTES = 1 << 20    # below this, jnp.broadcast_to wins outright


def _repeat_kernel(d_ref, o_ref):
    # d_ref: (1, L)  lane-dense repeat unit of `d` (d tiled L//H times), resident in VMEM.
    # o_ref: (TR, L) lane-dense output tile.
    # Sublane broadcast of a resident vreg slab; the store slot is the only busy slot.
    o_ref[...] = jnp.broadcast_to(d_ref[...], o_ref.shape)


def _choose_lane_width(units, H, max_lane=4096):
    """Pick lane width L = H*k with k | units, preferring L % 128 == 0.

    Uses direct math (lcm) first; only falls back to an O(sqrt(units)) divisor
    enumeration for awkward unit counts.
    """
    if H % 128 == 0 and H <= max_lane:
        L = H
    else:
        k0 = math.lcm(H, 128) // H
        if units % k0 == 0 and H * k0 <= max_lane:
            L = H * k0
        else:
            # Fallback: enumerate divisors of `units` up to sqrt(units).
            best = H            # k = 1 always valid
            best_dense = None
            i = 1
            while i * i <= units:
                if units % i == 0:
                    for k in (i, units // i):
                        Lc = H * k
                        if Lc <= max_lane:
                            if Lc % 128 == 0 and (best_dense is None or Lc > best_dense):
                                best_dense = Lc
                            if Lc > best:
                                best = Lc
                i += 1
            L = best_dense if best_dense is not None else best
    # Cheaply grow by powers of two while the flattening still works out.
    total = units * H
    while L * 2 <= max_lane and total % (L * 2) == 0:
        L *= 2
    return L


def _choose_row_tile(R, L, itemsize, max_tile_bytes):
    """TR = largest multiple of 8 under the byte budget (or R if everything fits)."""
    rows = max(8, (max_tile_bytes // (L * itemsize)) // 8 * 8)
    if rows >= R:
        return R              # single whole-array block (full first dim -> always legal)
    return rows


def model_forward(d, input_ids, hidden_states=None):
    """JAX/Pallas equivalent of Model(d).forward(hidden_states, input_ids).

    d:             (H,)  parameter vector (the module's `self.d`)
    input_ids:     (bs, seq_len) int — only its shape matters
    hidden_states: unused by the reference forward (kept for signature parity)
    """
    bs, seq_len = input_ids.shape
    H = d.shape[-1]
    units = bs * seq_len
    total = units * H
    itemsize = jnp.dtype(d.dtype).itemsize

    # Fast path: tiny outputs — the pallas_call launch + DMA setup costs far more
    # than the copy, and XLA's broadcast can also fuse into a consumer.
    if total * itemsize < _MIN_PALLAS_BYTES:
        return jnp.broadcast_to(d[None, None, :], (bs, seq_len, H))

    # Lane-dense flattened view of the output: (R, L), R*L == bs*seq_len*H.
    L = _choose_lane_width(units, H)
    R = total // L
    TR = _choose_row_tile(R, L, itemsize, _TILE_BYTES)

    # Ensure >= 2 grid steps when possible so both v7x TensorCores get work
    # from the "parallel" axis (and the pipeline has at least one overlap step).
    if pl.cdiv(R, TR) < 2 and R >= 16:
        half = -(-R // 2)                      # ceil(R/2)
        TR = min(TR, max(8, ((half + 7) // 8) * 8))
    grid = (pl.cdiv(R, TR),)

    # Lane-width repeat unit of d, built once in the wrapper (tiny).
    d_block = jnp.tile(d, L // H).reshape(1, L)

    flat = pl.pallas_call(
        _repeat_kernel,
        out_shape=jax.ShapeDtypeStruct((R, L), d.dtype),
        grid_spec=pltpu.PrefetchScalarGridSpec(
            num_scalar_prefetch=0,
            grid=grid,
            # Constant index_map -> d_block is DMA'd into VMEM once and stays resident.
            in_specs=[pl.BlockSpec((1, L), lambda i: (0, 0))],
            # cdiv grid: Pallas masks the partial last block if TR does not divide R.
            out_specs=pl.BlockSpec((TR, L), lambda i: (i, 0)),
        ),
        compiler_params=pltpu.CompilerParams(
            dimension_semantics=("parallel",),
            vmem_limit_bytes=_VMEM_LIMIT_BYTES,
        ),
    )(d_block)

    # Row-major reshape back to the PyTorch layout (metadata-only in the wrapper).
    return flat.reshape(bs, seq_len, H)


if __name__ == "__main__":
    key = jax.random.PRNGKey(0)
    k_d, k_ids, k_h, k_d2, k_d3 = jax.random.split(key, 5)

    # --- Case A: small benchmark shape (bs=2, seq_len=8, hidden=32) -> fast path ---
    bs, seq_len, hidden = 2, 8, 32
    d = jax.random.normal(k_d, (hidden,), dtype=jnp.float32)
    input_ids = jax.random.randint(k_ids, (bs, seq_len), 0, 1000, dtype=jnp.int32)
    hidden_states = jax.random.normal(k_h, (bs, seq_len, hidden), dtype=jnp.float32)

    out = jax.block_until_ready(model_forward(d, input_ids, hidden_states))
    ref = jnp.broadcast_to(d[None, None, :], (bs, seq_len, hidden))
    assert out.shape == (bs, seq_len, hidden), out.shape
    assert jnp.allclose(out, ref), "case A mismatch vs reference broadcast"

    # --- Case B: larger shape that exercises the Pallas kernel (power-of-two) ---
    bs_b, seq_b, hid_b = 2, 4096, 32
    d_b = jax.random.normal(k_d2, (hid_b,), dtype=jnp.float32)
    ids_b = jnp.zeros((bs_b, seq_b), dtype=jnp.int32)
    out_b = jax.block_until_ready(model_forward(d_b, ids_b))
    ref_b = jnp.broadcast_to(d_b[None, None, :], (bs_b, seq_b, hid_b))
    assert out_b.shape == (bs_b, seq_b, hid_b), out_b.shape
    assert jnp.allclose(out_b, ref_b), "case B mismatch vs reference broadcast"

    # --- Case C: awkward shape (non power-of-two rows -> partial last block) ---
    bs_c, seq_c, hid_c = 2, 1000, 160
    d_c = jax.random.normal(k_d3, (hid_c,), dtype=jnp.float32)
    ids_c = jnp.zeros((bs_c, seq_c), dtype=jnp.int32)
    out_c = jax.block_until_ready(model_forward(d_c, ids_c))
    ref_c = jnp.broadcast_to(d_c[None, None, :], (bs_c, seq_c, hid_c))
    assert out_c.shape == (bs_c, seq_c, hid_c), out_c.shape
    assert jnp.allclose(out_c, ref_c), "case C mismatch vs reference broadcast"

    print("KERNEL_OK")
</pallas_src>

<mosaic_0001>
module attributes {stable_mosaic.version = 11 : i64} {
  func.func @_repeat_kernel(%arg0: i32, %arg1: memref<1x4096xf32, #tpu.memory_space<vmem>>, %arg2: memref<32x4096xf32, #tpu.memory_space<vmem>>) attributes {dimension_semantics = [#tpu.dimension_semantics<parallel>], iteration_bounds = array<i64: 2>, scalar_prefetch = 0 : i64, scratch_operands = 0 : i64, tpu.core_type = #tpu.core_type<tc>, window_params = [{pipeline_mode = #tpu.pipeline_mode<synchronous>, transform_indices = @transform_0, window_bounds = array<i64: 1, 4096>}, {transform_indices = @transform_1, window_bounds = array<i64: 32, 4096>}]} {
    %c0 = arith.constant 0 : index
    %c0_0 = arith.constant 0 : index
    %0 = vector.load %arg1[%c0, %c0_0] : memref<1x4096xf32, #tpu.memory_space<vmem>>, vector<1x4096xf32>
    %1 = vector.shape_cast %0 : vector<1x4096xf32> to vector<1x4096xf32>
    %2 = vector.broadcast %1 : vector<1x4096xf32> to vector<32x4096xf32>
    %c0_1 = arith.constant 0 : index
    %c0_2 = arith.constant 0 : index
    %3 = vector.load %arg2[%c0_1, %c0_2] : memref<32x4096xf32, #tpu.memory_space<vmem>>, vector<32x4096xf32>
    tpu.vector_store %arg2[%c0_1, %c0_2], %2 {strides = array<i32>} : memref<32x4096xf32, #tpu.memory_space<vmem>>, vector<32x4096xf32>,
    return
  }
  func.func @transform_0(%arg0: i32) -> (i32, i32) {
    %c0_i32 = arith.constant 0 : i32
    %c0_i32_0 = arith.constant 0 : i32
    %c0_i32_1 = arith.constant 0 : i32
    return %c0_i32, %c0_i32_0 : i32, i32
  }
  func.func @transform_1(%arg0: i32) -> (i32, i32) {
    %c0_i32 = arith.constant 0 : i32
    %c0_i32_0 = arith.constant 0 : i32
    return %arg0, %c0_i32 : i32, i32
  }
}

</mosaic_0001>

<llo_original>
// kernel: tpu_custom_call.1
$region0: #{tpu_custom_call.1}
  #allocation0 [shape = 'u32[]', space=smem, size = 0x4, offset = 0x4, fixed_abs, tag = 'smem constant byte address 0x4 - core index']
  #allocation1 [shape = 'u32[72,128]{1,0:T(1,128)}', space=vmem, size = 0x9000, scoped, tag = 'internal scratch']
  %s0 = inlined_call_operand.hbm [shape: f32[1,4096], index: 0, kind: input, shape index: {}]
  %s1 = inlined_call_operand.hbm [shape: f32[64,4096], index: 1, kind: output, shape index: {}]
  %s2 = sld [smem:[#allocation0]]
  $region41: #{tpu_custom_call.1} parent=0
    _
  %s4 = ssub.s32 1, %s2
  %s5 = scalar_select 0, %s4, %s2
  $region1: #{tpu_custom_call.1} parent=0
    #allocation2 [shape = 'u8[16384]{0}', space=vmem, size = 0x4000, scoped, tag = 'input window, operand 0, single buffered']
    #allocation3 [shape = 's32[2]{0}', space=sflag, size = 0x8, scoped, tag = 'scoped memory for tpu_custom_call.1']
    #allocation4 [shape = 's32[2]{0}', space=sflag, size = 0x8, scoped, tag = 'scoped memory for tpu_custom_call.1']
    #allocation5 [shape = 'u8[1048576]{0}', space=vmem, size = 0x100000, scoped, tag = 'output window, operand 0']
    %6 = vsyncpa [#allocation3], 0
    %7 = vsyncpa [#allocation4], 0
    %s8 = scalar_lea.sflag [#allocation4], 1
    %9 = vsyncpa %s8, 0
    loop: start=0, step=1, limit=4
    $region2: #{tpu_custom_call.1} parent=1 // loop_pre_header
      _
    $region3: #{tpu_custom_call.1} parent=1 // loop_header
      %s11 = sphi 0, %s15
      %p12 = scmp.ge.s32.totalorder %s11, 4
      %s19 = sphi 0, %s19
      %s21 = sphi 0, %s19
      %s22 = sphi 0, %s21
      %s36 = sphi 0, %s22
      %s42 = sphi 0, %s44
      %s45 = sphi 0, %s42
      %s46 = sphi 0, %s45
      %s62 = sphi 0, %s46
    $region4: #{tpu_custom_call.1} parent=1 // loop_header_branch
      %14 = sbr.rel (%p12) target = $region8
    $region5: #{tpu_custom_call.1} parent=1 // loop_body
      %s16 = ssub.s32 %s11, 1
      %s17 = ssub.s32 %s11, 2
      %s18 = sadd.s32 %s11, 1
      %s20 = sadd.s32 %s19, 1
      %p23 = scmp.eq.s32.totalorder %s11, 1
      %p24 = scmp.ne.s32.totalorder %s19, %s21
      %p25 = scmp.eq.s32.totalorder %s11, 0
      %p26 = por %p24, %p25
      %p27 = scmp.ne.s32.totalorder %s19, %s21
      %p28 = scmp.eq.s32.totalorder %s16, 1
      %p29 = por %p27, %p28
      %p30 = scmp.ne.s32.totalorder %s21, %s22
      %p31 = scmp.eq.s32.totalorder %s16, 0
      %p32 = por %p30, %p31
      %p33 = scmp.ne.s32.totalorder %s21, %s22
      %p34 = scmp.eq.s32.totalorder %s17, 1
      %p35 = por %p33, %p34
      %p37 = scmp.ne.s32.totalorder %s22, %s36
      %p38 = scmp.eq.s32.totalorder %s17, 0
      %p39 = por %p37, %p38
      %s40 = ssub.s32 %s11, %s18
      %p41 = scmp.eq.s32.totalorder %s40, 0
      %s43 = sadd.s32 %s42, 1
      %s44 = scalar_select %p41, %s42, %s43
      %p47 = pneg %p41
      %p48 = scmp.eq.s32.totalorder %s11, 1
      %p49 = por %p47, %p48
      %p50 = scmp.ne.s32.totalorder %s42, %s45
      %p51 = scmp.eq.s32.totalorder %s11, 0
      %p52 = por %p50, %p51
      %p53 = scmp.ne.s32.totalorder %s42, %s45
      %p54 = scmp.eq.s32.totalorder %s16, 1
      %p55 = por %p53, %p54
      %p56 = scmp.ne.s32.totalorder %s45, %s46
      %p57 = scmp.eq.s32.totalorder %s16, 0
      %p58 = por %p56, %p57
      %p59 = scmp.ne.s32.totalorder %s45, %s46
      %p60 = scmp.eq.s32.totalorder %s17, 1
      %p61 = por %p59, %p60
      %p63 = scmp.ne.s32.totalorder %s46, %s62
      %p64 = scmp.eq.s32.totalorder %s17, 0
      %p65 = por %p63, %p64
      %p66 = scmp.le.s32.totalorder 1, %s11
      %p67 = scmp.lt.s32.totalorder %s11, 3
      %p68 = pnand %p66, %p67
      %p69 = pneg %p68
      // Predicated region
      $region9: #{tpu_custom_call.1} parent=5 // pred_check
        _
      $region10: #{tpu_custom_call.1} parent=5 // pred_check_branch
        %71 = sbr.rel (%p68) target = $region12
      $region11: #{tpu_custom_call.1} parent=5 // pred_region
        %s72 = ssub.s32 %s11, 1
        // Predicated region
        $region13: #{tpu_custom_call.1} parent=11 // pred_check
          %p73 = pneg %p32
        $region14: #{tpu_custom_call.1} parent=11 // pred_check_branch
          %75 = sbr.rel (%p73) target = $region16
        $region15: #{tpu_custom_call.1} parent=11 // pred_region
          %77 = vsyncadd [#allocation3], 0
          %s79 = sshll.u32 %s0, 4
          %s80 = int_to_ptr.hbm [resolvable:$true] %s79
          %s81 = sshll.u32 [#allocation2], 4
          %s82 = int_to_ptr.vmem [resolvable:$true] %s81
          %84 = dma.hbm_to_vmem [thread:$0]  %s80, 512, %s82, [#allocation3]
        $region16: #{tpu_custom_call.1} parent=11 // pred_fallthru
          _
      $region12: #{tpu_custom_call.1} parent=5 // pred_fallthru
        _
      %p85 = scmp.lt.s32.totalorder %s11, 2
      // Predicated region
      $region17: #{tpu_custom_call.1} parent=5 // pred_check
        %p86 = pneg %p85
      $region18: #{tpu_custom_call.1} parent=5 // pred_check_branch
        %88 = sbr.rel (%p86) target = $region20
      $region19: #{tpu_custom_call.1} parent=5 // pred_region
        _
      $region20: #{tpu_custom_call.1} parent=5 // pred_fallthru
        _
      %p89 = scmp.le.s32.totalorder 1, %s11
      %p90 = scmp.lt.s32.totalorder %s11, 3
      %p91 = pnand %p89, %p90
      %p92 = pneg %p91
      // Predicated region
      $region21: #{tpu_custom_call.1} parent=5 // pred_check
        _
      $region22: #{tpu_custom_call.1} parent=5 // pred_check_branch
        %94 = sbr.rel (%p91) target = $region24
      $region23: #{tpu_custom_call.1} parent=5 // pred_region
        %s95 = ssub.s32 %s11, 1
        // Predicated region
        $region25: #{tpu_custom_call.1} parent=23 // pred_check
          %p96 = pneg %p32
        $region26: #{tpu_custom_call.1} parent=23 // pred_check_branch
          %98 = sbr.rel (%p96) target = $region28
        $region27: #{tpu_custom_call.1} parent=23 // pred_region
          %100 = dma.done [#allocation3], 512
        $region28: #{tpu_custom_call.1} parent=23 // pred_fallthru
          _
        %p101 = pneg %p32
        %p102 = pneg %p29
        %p103 = pneg %p58
        %p104 = pneg %p55
        %s105 = sand.u32 %s45, 1
        %s106 = scalar_lea.sflag [#allocation4], %s105
        %s107 = sand.u32 %s45, 1
        %s108 = smul.addr %s107, 1024
        %s109 = scalar_lea.vmem [#allocation5], %s108
        %s110 = smul.u32 4, %s16
        %v111 = vld [vmem:[#allocation2] sm:$0xff]
        %v112 = vld [vmem:[#allocation2 + $0x8] sm:$0xff]
        %v113 = vld [vmem:[#allocation2 + $0x10] sm:$0xff]
        %v114 = vld [vmem:[#allocation2 + $0x18] sm:$0xff]
        %v119 = vperm.slane %v111, 0
        %v120 = vperm.slane %v111, 1
        %v121 = vperm.slane %v111, 2
        %v122 = vperm.slane %v111, 3
        %v123 = vperm.slane %v111, 4
        %v124 = vperm.slane %v111, 5
        %v125 = vperm.slane %v111, 6
        %v126 = vperm.slane %v111, 7
        %v127 = vperm.slane %v112, 0
        %v128 = vperm.slane %v112, 1
        %v129 = vperm.slane %v112, 2
        %v130 = vperm.slane %v112, 3
        %v131 = vperm.slane %v112, 4
        %v132 = vperm.slane %v112, 5
        %v133 = vperm.slane %v112, 6
        %v134 = vperm.slane %v112, 7
        %v135 = vperm.slane %v113, 0
        %v136 = vperm.slane %v113, 1
        %v137 = vperm.slane %v113, 2
        %v138 = vperm.slane %v113, 3
        %v139 = vperm.slane %v113, 4
        %v140 = vperm.slane %v113, 5
        %v141 = vperm.slane %v113, 6
        %v142 = vperm.slane %v113, 7
        %v143 = vperm.slane %v114, 0
        %v144 = vperm.slane %v114, 1
        %v145 = vperm.slane %v114, 2
        %v146 = vperm.slane %v114, 3
        %v147 = vperm.slane %v114, 4
        %v148 = vperm.slane %v114, 5
        %v149 = vperm.slane %v114, 6
        %v150 = vperm.slane %v114, 7
        %183 = vst [vmem:[%s109] sm:$0xff] %v119
        %184 = vst [vmem:[%s109 + $0x8] sm:$0xff] %v120
        %185 = vst [vmem:[%s109 + $0x10] sm:$0xff] %v121
        %186 = vst [vmem:[%s109 + $0x18] sm:$0xff] %v122
        %187 = vst [vmem:[%s109 + $0x20] sm:$0xff] %v123
        %188 = vst [vmem:[%s109 + $0x28] sm:$0xff] %v124
        %189 = vst [vmem:[%s109 + $0x30] sm:$0xff] %v125
        %190 = vst [vmem:[%s109 + $0x38] sm:$0xff] %v126
        %191 = vst [vmem:[%s109 + $0x40] sm:$0xff] %v127
        %192 = vst [vmem:[%s109 + $0x48] sm:$0xff] %v128
        %193 = vst [vmem:[%s109 + $0x50] sm:$0xff] %v129
        %194 = vst [vmem:[%s109 + $0x58] sm:$0xff] %v130
        %195 = vst [vmem:[%s109 + $0x60] sm:$0xff] %v131
        %196 = vst [vmem:[%s109 + $0x68] sm:$0xff] %v132
        %197 = vst [vmem:[%s109 + $0x70] sm:$0xff] %v133
        %198 = vst [vmem:[%s109 + $0x78] sm:$0xff] %v134
        %199 = vst [vmem:[%s109 + $0x80] sm:$0xff] %v135
        %200 = vst [vmem:[%s109 + $0x88] sm:$0xff] %v136
        %201 = vst [vmem:[%s109 + $0x90] sm:$0xff] %v137
        %202 = vst [vmem:[%s109 + $0x98] sm:$0xff] %v138
        %203 = vst [vmem:[%s109 + $0xa0] sm:$0xff] %v139
        %204 = vst [vmem:[%s109 + $0xa8] sm:$0xff] %v140
        %205 = vst [vmem:[%s109 + $0xb0] sm:$0xff] %v141
        %206 = vst [vmem:[%s109 + $0xb8] sm:$0xff] %v142
        %207 = vst [vmem:[%s109 + $0xc0] sm:$0xff] %v143
        %208 = vst [vmem:[%s109 + $0xc8] sm:$0xff] %v144
        %209 = vst [vmem:[%s109 + $0xd0] sm:$0xff] %v145
        %210 = vst [vmem:[%s109 + $0xd8] sm:$0xff] %v146
        %211 = vst [vmem:[%s109 + $0xe0] sm:$0xff] %v147
        %212 = vst [vmem:[%s109 + $0xe8] sm:$0xff] %v148
        %213 = vst [vmem:[%s109 + $0xf0] sm:$0xff] %v149
        %214 = vst [vmem:[%s109 + $0xf8] sm:$0xff] %v150
        %215 = vst [vmem:[%s109 + $0x100] sm:$0xff] %v119
        %216 = vst [vmem:[%s109 + $0x108] sm:$0xff] %v120
        %217 = vst [vmem:[%s109 + $0x110] sm:$0xff] %v121
        %218 = vst [vmem:[%s109 + $0x118] sm:$0xff] %v122
        %219 = vst [vmem:[%s109 + $0x120] sm:$0xff] %v123
        %220 = vst [vmem:[%s109 + $0x128] sm:$0xff] %v124
        %221 = vst [vmem:[%s109 + $0x130] sm:$0xff] %v125
        %222 = vst [vmem:[%s109 + $0x138] sm:$0xff] %v126
        %223 = vst [vmem:[%s109 + $0x140] sm:$0xff] %v127
        %224 = vst [vmem:[%s109 + $0x148] sm:$0xff] %v128
        %225 = vst [vmem:[%s109 + $0x150] sm:$0xff] %v129
        %226 = vst [vmem:[%s109 + $0x158] sm:$0xff] %v130
        %227 = vst [vmem:[%s109 + $0x160] sm:$0xff] %v131
        %228 = vst [vmem:[%s109 + $0x168] sm:$0xff] %v132
        %229 = vst [vmem:[%s109 + $0x170] sm:$0xff] %v133
        %230 = vst [vmem:[%s109 + $0x178] sm:$0xff] %v134
        %231 = vst [vmem:[%s109 + $0x180] sm:$0xff] %v135
        %232 = vst [vmem:[%s109 + $0x188] sm:$0xff] %v136
        %233 = vst [vmem:[%s109 + $0x190] sm:$0xff] %v137
        %234 = vst [vmem:[%s109 + $0x198] sm:$0xff] %v138
        %235 = vst [vmem:[%s109 + $0x1a0] sm:$0xff] %v139
        %236 = vst [vmem:[%s109 + $0x1a8] sm:$0xff] %v140
        %237 = vst [vmem:[%s109 + $0x1b0] sm:$0xff] %v141
        %238 = vst [vmem:[%s109 + $0x1b8] sm:$0xff] %v142
        %239 = vst [vmem:[%s109 + $0x1c0] sm:$0xff] %v143
        %240 = vst [vmem:[%s109 + $0x1c8] sm:$0xff] %v144
        %241 = vst [vmem:[%s109 + $0x1d0] sm:$0xff] %v145
        %242 = vst [vmem:[%s109 + $0x1d8] sm:$0xff] %v146
        %243 = vst [vmem:[%s109 + $0x1e0] sm:$0xff] %v147
        %244 = vst [vmem:[%s109 + $0x1e8] sm:$0xff] %v148
        %245 = vst [vmem:[%s109 + $0x1f0] sm:$0xff] %v149
        %246 = vst [vmem:[%s109 + $0x1f8] sm:$0xff] %v150
        %247 = vst [vmem:[%s109 + $0x200] sm:$0xff] %v119
        %248 = vst [vmem:[%s109 + $0x208] sm:$0xff] %v120
        %249 = vst [vmem:[%s109 + $0x210] sm:$0xff] %v121
        %250 = vst [vmem:[%s109 + $0x218] sm:$0xff] %v122
        %251 = vst [vmem:[%s109 + $0x220] sm:$0xff] %v123
        %252 = vst [vmem:[%s109 + $0x228] sm:$0xff] %v124
        %253 = vst [vmem:[%s109 + $0x230] sm:$0xff] %v125
        %254 = vst [vmem:[%s109 + $0x238] sm:$0xff] %v126
        %255 = vst [vmem:[%s109 + $0x240] sm:$0xff] %v127
        %256 = vst [vmem:[%s109 + $0x248] sm:$0xff] %v128
        %257 = vst [vmem:[%s109 + $0x250] sm:$0xff] %v129
        %258 = vst [vmem:[%s109 + $0x258] sm:$0xff] %v130
        %259 = vst [vmem:[%s109 + $0x260] sm:$0xff] %v131
        %260 = vst [vmem:[%s109 + $0x268] sm:$0xff] %v132
        %261 = vst [vmem:[%s109 + $0x270] sm:$0xff] %v133
        %262 = vst [vmem:[%s109 + $0x278] sm:$0xff] %v134
        %263 = vst [vmem:[%s109 + $0x280] sm:$0xff] %v135
        %264 = vst [vmem:[%s109 + $0x288] sm:$0xff] %v136
        %265 = vst [vmem:[%s109 + $0x290] sm:$0xff] %v137
        %266 = vst [vmem:[%s109 + $0x298] sm:$0xff] %v138
        %267 = vst [vmem:[%s109 + $0x2a0] sm:$0xff] %v139
        %268 = vst [vmem:[%s109 + $0x2a8] sm:$0xff] %v140
        %269 = vst [vmem:[%s109 + $0x2b0] sm:$0xff] %v141
        %270 = vst [vmem:[%s109 + $0x2b8] sm:$0xff] %v142
        %271 = vst [vmem:[%s109 + $0x2c0] sm:$0xff] %v143
        %272 = vst [vmem:[%s109 + $0x2c8] sm:$0xff] %v144
        %273 = vst [vmem:[%s109 + $0x2d0] sm:$0xff] %v145
        %274 = vst [vmem:[%s109 + $0x2d8] sm:$0xff] %v146
        %275 = vst [vmem:[%s109 + $0x2e0] sm:$0xff] %v147
        %276 = vst [vmem:[%s109 + $0x2e8] sm:$0xff] %v148
        %277 = vst [vmem:[%s109 + $0x2f0] sm:$0xff] %v149
        %278 = vst [vmem:[%s109 + $0x2f8] sm:$0xff] %v150
        %279 = vst [vmem:[%s109 + $0x300] sm:$0xff] %v119
        %280 = vst [vmem:[%s109 + $0x308] sm:$0xff] %v120
        %281 = vst [vmem:[%s109 + $0x310] sm:$0xff] %v121
        %282 = vst [vmem:[%s109 + $0x318] sm:$0xff] %v122
        %283 = vst [vmem:[%s109 + $0x320] sm:$0xff] %v123
        %284 = vst [vmem:[%s109 + $0x328] sm:$0xff] %v124
        %285 = vst [vmem:[%s109 + $0x330] sm:$0xff] %v125
        %286 = vst [vmem:[%s109 + $0x338] sm:$0xff] %v126
        %287 = vst [vmem:[%s109 + $0x340] sm:$0xff] %v127
        %288 = vst [vmem:[%s109 + $0x348] sm:$0xff] %v128
        %289 = vst [vmem:[%s109 + $0x350] sm:$0xff] %v129
        %290 = vst [vmem:[%s109 + $0x358] sm:$0xff] %v130
        %291 = vst [vmem:[%s109 + $0x360] sm:$0xff] %v131
        %292 = vst [vmem:[%s109 + $0x368] sm:$0xff] %v132
        %293 = vst [vmem:[%s109 + $0x370] sm:$0xff] %v133
        %294 = vst [vmem:[%s109 + $0x378] sm:$0xff] %v134
        %295 = vst [vmem:[%s109 + $0x380] sm:$0xff] %v135
        %296 = vst [vmem:[%s109 + $0x388] sm:$0xff] %v136
        %297 = vst [vmem:[%s109 + $0x390] sm:$0xff] %v137
        %298 = vst [vmem:[%s109 + $0x398] sm:$0xff] %v138
        %299 = vst [vmem:[%s109 + $0x3a0] sm:$0xff] %v139
        %300 = vst [vmem:[%s109 + $0x3a8] sm:$0xff] %v140
        %301 = vst [vmem:[%s109 + $0x3b0] sm:$0xff] %v141
        %302 = vst [vmem:[%s109 + $0x3b8] sm:$0xff] %v142
        %303 = vst [vmem:[%s109 + $0x3c0] sm:$0xff] %v143
        %304 = vst [vmem:[%s109 + $0x3c8] sm:$0xff] %v144
        %305 = vst [vmem:[%s109 + $0x3d0] sm:$0xff] %v145
        %306 = vst [vmem:[%s109 + $0x3d8] sm:$0xff] %v146
        %307 = vst [vmem:[%s109 + $0x3e0] sm:$0xff] %v147
        %308 = vst [vmem:[%s109 + $0x3e8] sm:$0xff] %v148
        %309 = vst [vmem:[%s109 + $0x3f0] sm:$0xff] %v149
        %310 = vst [vmem:[%s109 + $0x3f8] sm:$0xff] %v150
        %s311 = sand.u32 %s45, 1
        %s312 = scalar_lea.sflag [#allocation4], %s311
        %s313 = sand.u32 %s45, 1
        %s314 = smul.addr %s313, 1024
        %s315 = scalar_lea.vmem [#allocation5], %s314
        // Predicated region
        $region29: #{tpu_custom_call.1} parent=23 // pred_check
          %p316 = pneg %p55
        $region30: #{tpu_custom_call.1} parent=23 // pred_check_branch
          %318 = sbr.rel (%p316) target = $region32
        $region31: #{tpu_custom_call.1} parent=23 // pred_region
          %s319 = smul.u32 4, %s16
          %321 = vsyncadd %s312, 0
          %s322 = smul.addr %s319, 32
          %s323 = smul.addr %s322, 8
          %s324 = scalar_lea.hbm %s1, %s323
          %s325 = sshll.u32 %s315, 4
          %s326 = int_to_ptr.vmem [resolvable:$true] %s325
          %s327 = sshll.u32 %s324, 4
          %s328 = int_to_ptr.hbm [resolvable:$true] %s327
          %333 = dma.vmem_to_hbm [thread:$0]  %s326, 16384, %s328, %s312, 4096, 4096, 256
        $region32: #{tpu_custom_call.1} parent=23 // pred_fallthru
          _
      $region24: #{tpu_custom_call.1} parent=5 // pred_fallthru
        _
      %p334 = scmp.le.s32.totalorder 2, %s11
      // Predicated region
      $region33: #{tpu_custom_call.1} parent=5 // pred_check
        %p335 = pneg %p334
      $region34: #{tpu_custom_call.1} parent=5 // pred_check_branch
        %337 = sbr.rel (%p335) target = $region36
      $region35: #{tpu_custom_call.1} parent=5 // pred_region
        %s338 = ssub.s32 %s11, 2
        // Predicated region
        $region37: #{tpu_custom_call.1} parent=35 // pred_check
          %p339 = pneg %p61
        $region38: #{tpu_custom_call.1} parent=35 // pred_check_branch
          %341 = sbr.rel (%p339) target = $region40
        $region39: #{tpu_custom_call.1} parent=35 // pred_region
          %s342 = sand.u32 %s46, 1
          %s343 = scalar_lea.sflag [#allocation4], %s342
          %s344 = sand.u32 %s46, 1
          %s345 = smul.addr %s344, 1024
          %s346 = scalar_lea.vmem [#allocation5], %s345
          %348 = dma.done %s343, 16384
        $region40: #{tpu_custom_call.1} parent=35 // pred_fallthru
          _
      $region36: #{tpu_custom_call.1} parent=5 // pred_fallthru
        _
    $region6: #{tpu_custom_call.1} parent=1 // loop_footer
      %s15 = sadd.s32 1, %s11
    $region7: #{tpu_custom_call.1} parent=1 // loop_footer_branch
      %10 = sbr.rel target = $region3
    $region8: #{tpu_custom_call.1} parent=1 // loop_exit
      _
    %349 = vsyncpa [#allocation3], 1
    %s350 = scalar_lea.sflag [#allocation3], 1
    %351 = vsyncpa %s350, 1
    %352 = vsyncpa [#allocation4], 1
    %s353 = scalar_lea.sflag [#allocation4], 1
    %354 = vsyncpa %s353, 1

</llo_original>
